<compile_context>
chip_gen: v6e
topology: v6e:2x2x1
jax: 0.10.0
libtpu: 0.0.40
codegen_flags: <defaults>
</compile_context>

<pallas_src>
import jax
import jax.numpy as jnp
from jax.experimental import pallas as pl
from jax.experimental.pallas import tpu as pltpu

_LANE = 128


def _make_tlu_kernel(threshold):
    """Build an elementwise clamp kernel with the threshold baked in."""
    def kernel(x_ref, o_ref):
        x = x_ref[...]
        # min(max(x, -t), t) == torch.clamp(x, -t, t) (incl. NaN propagation).
        o_ref[...] = jnp.minimum(jnp.maximum(x, -threshold), threshold)
    return kernel


def tlu(x, threshold, *, row_tile=2048):
    """Elementwise clamp(x, -threshold, +threshold) via a Pallas TPU kernel.

    x: arbitrary-shape array (e.g. NCHW). Returns same shape/dtype.
    threshold: static Python float.
    """
    orig_shape = x.shape
    orig_dtype = x.dtype
    total = x.size
    itemsize = jnp.dtype(orig_dtype).itemsize

    x_flat = jnp.ravel(x)

    # Only pad to a lane multiple (128), and only when actually needed.
    padded = pl.cdiv(total, _LANE) * _LANE
    needs_pad = padded != total
    if needs_pad:
        # clamp(0) == 0, so zero padding is semantically inert.
        x_flat = jnp.pad(x_flat, (0, padded - total))
    rows = padded // _LANE
    x2d = x_flat.reshape(rows, _LANE)

    # Block rows: big (~1 MiB f32 blocks) for bandwidth, but capped to the
    # (8-aligned) array extent so tiny inputs don't waste VMEM. Always a
    # multiple of 8 (sublane rule).
    block_rows = min(row_tile, ((rows + 7) // 8) * 8)
    nblocks = pl.cdiv(rows, block_rows)

    out2d = pl.pallas_call(
        _make_tlu_kernel(float(threshold)),
        out_shape=jax.ShapeDtypeStruct((rows, _LANE), orig_dtype),
        grid=(nblocks,),
        in_specs=[pl.BlockSpec((block_rows, _LANE), lambda i: (i, 0))],
        out_specs=pl.BlockSpec((block_rows, _LANE), lambda i: (i, 0)),
        compiler_params=pltpu.CompilerParams(
            dimension_semantics=("parallel",),   # lets v7x shard across 2 TCs
            vmem_limit_bytes=32 * 1024 * 1024,   # explicit: v5e default is 16 MiB
        ),
        cost_estimate=pl.CostEstimate(
            flops=2 * total,                      # max + min per element
            transcendentals=0,
            bytes_accessed=2 * total * itemsize,  # one read + one write pass
        ),
    )(x2d)

    out_flat = out2d.reshape(-1)
    if needs_pad:
        out_flat = out_flat[:total]
    return out_flat.reshape(orig_shape)


if __name__ == "__main__":
    key = jax.random.PRNGKey(0)
    # Small conv-net-like activation: NCHW = (2, 4, 16, 16)
    x = jax.random.normal(key, (2, 4, 16, 16), dtype=jnp.float32) * 3.0
    threshold = 1.0

    out = tlu(x, threshold)
    out = jax.block_until_ready(out)

    # Correctness check against plain-JAX reference.
    ref = jnp.clip(x, -threshold, threshold)
    assert out.shape == x.shape
    assert out.dtype == x.dtype
    assert jnp.allclose(out, ref), "mismatch vs reference clamp"

    print("KERNEL_OK")
</pallas_src>

<mosaic_0001>
module attributes {stable_mosaic.version = 11 : i64} {
  func.func @kernel(%arg0: i32, %arg1: memref<16x128xf32, #tpu.memory_space<vmem>>, %arg2: memref<16x128xf32, #tpu.memory_space<vmem>>) attributes {dimension_semantics = [#tpu.dimension_semantics<parallel>], iteration_bounds = array<i64: 1>, scalar_prefetch = 0 : i64, scratch_operands = 0 : i64, tpu.core_type = #tpu.core_type<tc>, window_params = [{transform_indices = @transform_0, window_bounds = array<i64: 16, 128>}, {transform_indices = @transform_1, window_bounds = array<i64: 16, 128>}]} {
    %c0 = arith.constant 0 : index
    %c0_0 = arith.constant 0 : index
    %0 = vector.load %arg1[%c0, %c0_0] : memref<16x128xf32, #tpu.memory_space<vmem>>, vector<16x128xf32>
    %cst = arith.constant -1.000000e+00 : f32
    %1 = vector.broadcast %cst : f32 to vector<16x128xf32>
    %2 = arith.maximumf %0, %1 : vector<16x128xf32>
    %cst_1 = arith.constant 1.000000e+00 : f32
    %3 = vector.broadcast %cst_1 : f32 to vector<16x128xf32>
    %4 = arith.minimumf %2, %3 : vector<16x128xf32>
    %c0_2 = arith.constant 0 : index
    %c0_3 = arith.constant 0 : index
    %5 = vector.load %arg2[%c0_2, %c0_3] : memref<16x128xf32, #tpu.memory_space<vmem>>, vector<16x128xf32>
    tpu.vector_store %arg2[%c0_2, %c0_3], %4 {strides = array<i32>} : memref<16x128xf32, #tpu.memory_space<vmem>>, vector<16x128xf32>,
    return
  }
  func.func @transform_0(%arg0: i32) -> (i32, i32) {
    %c0_i32 = arith.constant 0 : i32
    %c0_i32_0 = arith.constant 0 : i32
    return %arg0, %c0_i32 : i32, i32
  }
  func.func @transform_1(%arg0: i32) -> (i32, i32) {
    %c0_i32 = arith.constant 0 : i32
    %c0_i32_0 = arith.constant 0 : i32
    return %arg0, %c0_i32 : i32, i32
  }
}

</mosaic_0001>

<llo_original>
// kernel: tpu_custom_call.1
$region0: #{tpu_custom_call.1}
  #allocation0 [shape = 'u32[]', space=smem, size = 0x4, offset = 0x4, fixed_abs, tag = 'smem constant byte address 0x4 - core index']
  #allocation1 [shape = 'u32[144,128]{1,0:T(1,128)}', space=vmem, size = 0x12000, scoped, tag = 'internal scratch']
  %s0 = inlined_call_operand.hbm [shape: f32[16,128], index: 0, kind: input, shape index: {}]
  %s1 = inlined_call_operand.hbm [shape: f32[16,128], index: 1, kind: output, shape index: {}]
  %s2 = sld [smem:[#allocation0]]
  $region18: #{tpu_custom_call.1} parent=0
    _
  %s4 = ssub.s32 1, %s2
  %s5 = scalar_select 0, %s4, %s2
  $region1: #{tpu_custom_call.1} parent=0
    #allocation2 [shape = 'u8[8192]{0}', space=vmem, size = 0x2000, scoped, tag = 'input window, operand 0, single buffered']
    #allocation3 [shape = 's32[1]{0}', space=sflag, size = 0x4, scoped, tag = 'scoped memory for tpu_custom_call.1']
    #allocation4 [shape = 's32[1]{0}', space=sflag, size = 0x4, scoped, tag = 'scoped memory for tpu_custom_call.1']
    #allocation5 [shape = 'u8[8192]{0}', space=vmem, size = 0x2000, scoped, tag = 'output window, operand 0, single buffered']
    %6 = vsyncpa [#allocation3], 0
    %7 = vsyncpa [#allocation4], 0
    // Predicated region
    $region2: #{tpu_custom_call.1} parent=1 // pred_check
      _
    $region3: #{tpu_custom_call.1} parent=1 // pred_check_branch
      %9 = sbr.rel (0) target = $region5
    $region4: #{tpu_custom_call.1} parent=1 // pred_region
      %s11 = ssub.s32 256, 256
      %12 = vsyncadd [#allocation3], %s11
      %s13 = sshll.u32 [#allocation2], 4
      %s14 = int_to_ptr.vmem [resolvable:$true] %s13
      %19 = dma.hbm_to_vmem [thread:$0]  %s0, 256, %s14, [#allocation3], 128, 128, 8
    $region5: #{tpu_custom_call.1} parent=1 // pred_fallthru
      _
    // Predicated region
    $region6: #{tpu_custom_call.1} parent=1 // pred_check
      _
    $region7: #{tpu_custom_call.1} parent=1 // pred_check_branch
      %21 = sbr.rel (0) target = $region9
    $region8: #{tpu_custom_call.1} parent=1 // pred_region
      %22 = dma.done [#allocation3], 256
    $region9: #{tpu_custom_call.1} parent=1 // pred_fallthru
      _
    %v23 = vld [vmem:[#allocation2] sm:$0xff]
    %v24 = vld [vmem:[#allocation2 + $0x8] sm:$0xff]
    %v25 = vmax.f32 %v23, -1.0
    %v26 = vmax.f32 %v24, -1.0
    %v27 = vmin.f32 %v25, 1.0
    %v28 = vmin.f32 %v26, 1.0
    %29 = vst [vmem:[#allocation5] sm:$0xff] %v27
    %30 = vst [vmem:[#allocation5 + $0x8] sm:$0xff] %v28
    // Predicated region
    $region10: #{tpu_custom_call.1} parent=1 // pred_check
      _
    $region11: #{tpu_custom_call.1} parent=1 // pred_check_branch
      %32 = sbr.rel (0) target = $region13
    $region12: #{tpu_custom_call.1} parent=1 // pred_region
      %s34 = ssub.s32 256, 256
      %35 = vsyncadd [#allocation4], %s34
      %s36 = sshll.u32 [#allocation5], 4
      %s37 = int_to_ptr.vmem [resolvable:$true] %s36
      %42 = dma.vmem_to_hbm [thread:$0]  %s37, 256, %s1, [#allocation4], 128, 128, 8
    $region13: #{tpu_custom_call.1} parent=1 // pred_fallthru
      _
    // Predicated region
    $region14: #{tpu_custom_call.1} parent=1 // pred_check
      _
    $region15: #{tpu_custom_call.1} parent=1 // pred_check_branch
      %44 = sbr.rel (0) target = $region17
    $region16: #{tpu_custom_call.1} parent=1 // pred_region
      %45 = dma.done [#allocation4], 256
    $region17: #{tpu_custom_call.1} parent=1 // pred_fallthru
      _
    %46 = vsyncpa [#allocation3], 1
    %47 = vsyncpa [#allocation4], 1

</llo_original>
